<compile_context>
chip_gen: v7x
topology: tpu7x:2x2x1
jax: 0.10.0
libtpu: 0.0.40
codegen_flags: <defaults>
</compile_context>

<pallas_src>
import jax
import jax.numpy as jnp
from jax.experimental import pallas as pl
from jax.experimental.pallas import tpu as pltpu


def classifier_kernel(x_ref, w1_ref, b1_ref, w2_ref, b2_ref, w3_ref, b3_ref,
                      o_ref):
    # --- fc1 + relu ---
    # Cast the f32 x tile to the (bf16) weight dtype right before the dot so
    # the MXU runs bf16 with f32 accumulation; the HBM stream of x stays f32.
    x = x_ref[...].astype(w1_ref.dtype)
    h1 = jnp.dot(x, w1_ref[...], preferred_element_type=jnp.float32)
    h1 = jnp.maximum(h1 + b1_ref[...], 0.0)

    # --- fc2 + relu --- (f32; tiny — <1% of bytes/FLOPs)
    h2 = jnp.dot(h1, w2_ref[...], preferred_element_type=jnp.float32)
    h2 = jnp.maximum(h2 + b2_ref[...], 0.0)

    # --- fc3 ---
    logits = jnp.dot(h2, w3_ref[...], preferred_element_type=jnp.float32)
    logits = logits + b3_ref[...]

    # --- log_softmax over dim=1 (class axis), stable max-shifted form, f32 ---
    m = jnp.max(logits, axis=-1, keepdims=True)
    shifted = logits - m
    lse = jnp.log(jnp.sum(jnp.exp(shifted), axis=-1, keepdims=True))
    o_ref[...] = shifted - lse


def _round_up(a, m):
    return ((a + m - 1) // m) * m


def _round_down(a, m):
    return (a // m) * m


def _pick_batch_tile(B, D, tile_batch=None):
    """Batch tile: multiple of 8 sublanes (or == B), VMEM-budgeted, >=2 blocks
    for large batches so the 'parallel' axis can shard across v7x's 2 TCs."""
    if tile_batch is not None:
        return int(tile_batch)
    x_item = 4  # f32 x stream
    budget = 24 * 1024 * 1024  # bytes for the double-buffered x tiles
    tb_budget = max(8, min(1024, _round_down(budget // (2 * D * x_item), 8)))
    if B <= tb_budget and B <= 512:
        # Single full-dim block: legal (block dim == full array dim), no
        # masking, and too little work to be worth splitting across cores.
        return B
    half = _round_up((B + 1) // 2, 8)      # at least 2 grid steps (v7x 2 TCs)
    return max(8, min(tb_budget, half))


def classifier_forward(x, params, *, use_bf16_matmul=True, tile_batch=None):
    """x: (B, 1, max_seq_len*emb_dim). Returns (B, 5) f32 log-probs."""
    w1, b1, w2, b2, w3, b3 = params
    # Glue: replicate `inputs.squeeze(1).float()` (free reshape / no-op cast).
    x2d = jnp.squeeze(x, axis=1).astype(jnp.float32)
    B, D = x2d.shape
    h1d = w1.shape[1]
    h2d = w2.shape[1]
    n_classes = w3.shape[1]

    # W1 is tiny and VMEM-resident; pre-cast it once. x stays f32 in HBM and
    # is cast to bf16 inside the kernel (no extra HBM pass over x).
    w1_in = w1.astype(jnp.bfloat16) if use_bf16_matmul else w1
    w1_item = jnp.dtype(w1_in.dtype).itemsize

    TB = _pick_batch_tile(B, D, tile_batch)
    grid_b = pl.cdiv(B, TB)

    # Explicit VMEM limit from the computed footprint (+ headroom); stays well
    # under v7x's 64 MiB physical and v5e/v6e's 128 MiB physical.
    vmem_bytes = (2 * TB * D * 4                       # double-buffered x tiles
                  + D * h1d * w1_item                  # resident W1
                  + (h1d * h2d + h2d * n_classes
                     + h1d + h2d + n_classes) * 4      # resident w2/w3/biases
                  + 2 * TB * n_classes * 4             # double-buffered out
                  + (4 << 20))                         # headroom
    vmem_bytes = int(min(vmem_bytes, 60 * 1024 * 1024))

    cost = pl.CostEstimate(
        flops=2 * B * (D * h1d + h1d * h2d + h2d * n_classes),
        transcendentals=B * (n_classes + 1),
        bytes_accessed=(B * D * 4                      # f32 x stream (read once)
                        + D * h1d * w1_item            # w1
                        + (h1d * h2d + h2d * n_classes
                           + h1d + h2d + n_classes) * 4
                        + B * n_classes * 4),          # output
    )

    # Weights/biases: full-array blocks, constant index_map -> VMEM-resident.
    def resident(a):
        nd = a.ndim
        return pl.BlockSpec(a.shape, lambda i, _nd=nd: (0,) * _nd)

    out = pl.pallas_call(
        classifier_kernel,
        out_shape=jax.ShapeDtypeStruct((B, n_classes), jnp.float32),
        grid=(grid_b,),
        in_specs=[
            pl.BlockSpec((TB, D), lambda i: (i, 0)),   # x: streamed per tile
            resident(w1_in), resident(b1),
            resident(w2), resident(b2),
            resident(w3), resident(b3),
        ],
        out_specs=pl.BlockSpec((TB, n_classes), lambda i: (i, 0)),
        compiler_params=pltpu.CompilerParams(
            dimension_semantics=("parallel",),   # shard batch tiles across TCs
            vmem_limit_bytes=vmem_bytes,
        ),
        cost_estimate=cost,
    )(x2d, w1_in, b1, w2, b2, w3, b3)
    return out


def init_params(key, in_dim, hidden1=16, hidden2=16, n_classes=5):
    """Deterministic init mimicking nn.Linear default (uniform +/- 1/sqrt(fan_in)).
    Weights stored as (in, out) = transpose of PyTorch's (out, in)."""
    ks = jax.random.split(key, 6)

    def linear(kw, kb, fan_in, fan_out):
        bound = 1.0 / jnp.sqrt(jnp.float32(fan_in))
        w = jax.random.uniform(kw, (fan_in, fan_out), jnp.float32, -bound, bound)
        b = jax.random.uniform(kb, (1, fan_out), jnp.float32, -bound, bound)
        return w, b

    w1, b1 = linear(ks[0], ks[1], in_dim, hidden1)
    w2, b2 = linear(ks[2], ks[3], hidden1, hidden2)
    w3, b3 = linear(ks[4], ks[5], hidden2, n_classes)
    return (w1, b1, w2, b2, w3, b3)


def _reference(x, params, use_bf16_matmul=True):
    """Pure-JAX reference matching the kernel's bf16-matmul / f32-accum path."""
    w1, b1, w2, b2, w3, b3 = params
    x2d = jnp.squeeze(x, axis=1).astype(jnp.float32)
    if use_bf16_matmul:
        xk = x2d.astype(jnp.bfloat16).astype(jnp.float32)
        w1k = w1.astype(jnp.bfloat16).astype(jnp.float32)
    else:
        xk, w1k = x2d, w1
    h1 = jnp.maximum(xk @ w1k + b1, 0.0)
    h2 = jnp.maximum(h1 @ w2 + b2, 0.0)
    logits = h2 @ w3 + b3
    return jax.nn.log_softmax(logits, axis=1)


if __name__ == "__main__":
    # Small shapes consistent with the module's forward.
    batch = 2
    max_seq_len = 8
    emb_dim = 32          # small stand-in for the original emb_dim = 300
    in_dim = max_seq_len * emb_dim

    key = jax.random.PRNGKey(0)
    k_x, k_p, k_x2 = jax.random.split(key, 3)

    x = jax.random.normal(k_x, (batch, 1, in_dim), dtype=jnp.float32)
    params = init_params(k_p, in_dim, hidden1=16, hidden2=16, n_classes=5)

    # Test 1: small batch (single full-dim block).
    log_probs = classifier_forward(x, params)
    jax.block_until_ready(log_probs)
    assert log_probs.shape == (batch, 5)
    row_sums = jnp.exp(log_probs).sum(axis=1)
    assert jnp.allclose(row_sums, 1.0, atol=1e-5)
    ref = _reference(x, params)
    assert jnp.allclose(log_probs, ref, atol=2e-3, rtol=2e-3)

    # Test 2: multi-block grid with a ragged last block (no jnp.pad).
    batch2 = 20
    x2 = jax.random.normal(k_x2, (batch2, 1, in_dim), dtype=jnp.float32)
    log_probs2 = classifier_forward(x2, params, tile_batch=8)  # grid=3, last block partial
    jax.block_until_ready(log_probs2)
    assert log_probs2.shape == (batch2, 5)
    assert jnp.allclose(jnp.exp(log_probs2).sum(axis=1), 1.0, atol=1e-5)
    ref2 = _reference(x2, params)
    assert jnp.allclose(log_probs2, ref2, atol=2e-3, rtol=2e-3)

    print("KERNEL_OK")
</pallas_src>

<mosaic_0001>
module attributes {stable_mosaic.version = 11 : i64} {
  func.func @classifier_kernel(%arg0: i32, %arg1: memref<2x256xf32, #tpu.memory_space<vmem>>, %arg2: memref<256x16xbf16, #tpu.memory_space<vmem>>, %arg3: memref<1x16xf32, #tpu.memory_space<vmem>>, %arg4: memref<16x16xf32, #tpu.memory_space<vmem>>, %arg5: memref<1x16xf32, #tpu.memory_space<vmem>>, %arg6: memref<16x5xf32, #tpu.memory_space<vmem>>, %arg7: memref<1x5xf32, #tpu.memory_space<vmem>>, %arg8: memref<2x5xf32, #tpu.memory_space<vmem>>) attributes {dimension_semantics = [#tpu.dimension_semantics<parallel>], iteration_bounds = array<i64: 1>, scalar_prefetch = 0 : i64, scratch_operands = 0 : i64, tpu.core_type = #tpu.core_type<tc>, window_params = [{transform_indices = @transform_0, window_bounds = array<i64: 2, 256>}, {pipeline_mode = #tpu.pipeline_mode<synchronous>, transform_indices = @transform_1, window_bounds = array<i64: 256, 16>}, {pipeline_mode = #tpu.pipeline_mode<synchronous>, transform_indices = @transform_2, window_bounds = array<i64: 1, 16>}, {pipeline_mode = #tpu.pipeline_mode<synchronous>, transform_indices = @transform_3, window_bounds = array<i64: 16, 16>}, {pipeline_mode = #tpu.pipeline_mode<synchronous>, transform_indices = @transform_4, window_bounds = array<i64: 1, 16>}, {pipeline_mode = #tpu.pipeline_mode<synchronous>, transform_indices = @transform_5, window_bounds = array<i64: 16, 5>}, {pipeline_mode = #tpu.pipeline_mode<synchronous>, transform_indices = @transform_6, window_bounds = array<i64: 1, 5>}, {transform_indices = @transform_7, window_bounds = array<i64: 2, 5>}]} {
    %c0 = arith.constant 0 : index
    %c0_0 = arith.constant 0 : index
    %0 = vector.load %arg1[%c0, %c0_0] : memref<2x256xf32, #tpu.memory_space<vmem>>, vector<2x256xf32>
    %1 = arith.truncf %0 : vector<2x256xf32> to vector<2x256xbf16>
    %c0_1 = arith.constant 0 : index
    %c0_2 = arith.constant 0 : index
    %2 = vector.load %arg2[%c0_1, %c0_2] : memref<256x16xbf16, #tpu.memory_space<vmem>>, vector<256x16xbf16>
    %cst = arith.constant dense<0.000000e+00> : vector<2x16xf32>
    %3 = tpu.matmul %1, %2, %cst {dimension_numbers = #tpu.dot_dimension_numbers<[1], [0], [0], [1], [0, 0, 1, 1], [], []>} : vector<2x256xbf16>, vector<256x16xbf16>, vector<2x16xf32> -> vector<2x16xf32>
    %c0_3 = arith.constant 0 : index
    %c0_4 = arith.constant 0 : index
    %4 = vector.load %arg3[%c0_3, %c0_4] : memref<1x16xf32, #tpu.memory_space<vmem>>, vector<1x16xf32>
    %5 = vector.broadcast %4 : vector<1x16xf32> to vector<2x16xf32>
    %6 = arith.addf %3, %5 : vector<2x16xf32>
    %cst_5 = arith.constant 0.000000e+00 : f32
    %7 = vector.broadcast %cst_5 : f32 to vector<2x16xf32>
    %8 = arith.maximumf %6, %7 : vector<2x16xf32>
    %c0_6 = arith.constant 0 : index
    %c0_7 = arith.constant 0 : index
    %9 = vector.load %arg4[%c0_6, %c0_7] : memref<16x16xf32, #tpu.memory_space<vmem>>, vector<16x16xf32>
    %cst_8 = arith.constant dense<0.000000e+00> : vector<2x16xf32>
    %10 = tpu.matmul %8, %9, %cst_8 {dimension_numbers = #tpu.dot_dimension_numbers<[1], [0], [0], [1], [0, 0, 1, 1], [], []>} : vector<2x16xf32>, vector<16x16xf32>, vector<2x16xf32> -> vector<2x16xf32>
    %c0_9 = arith.constant 0 : index
    %c0_10 = arith.constant 0 : index
    %11 = vector.load %arg5[%c0_9, %c0_10] : memref<1x16xf32, #tpu.memory_space<vmem>>, vector<1x16xf32>
    %12 = vector.broadcast %11 : vector<1x16xf32> to vector<2x16xf32>
    %13 = arith.addf %10, %12 : vector<2x16xf32>
    %cst_11 = arith.constant 0.000000e+00 : f32
    %14 = vector.broadcast %cst_11 : f32 to vector<2x16xf32>
    %15 = arith.maximumf %13, %14 : vector<2x16xf32>
    %c0_12 = arith.constant 0 : index
    %c0_13 = arith.constant 0 : index
    %16 = vector.load %arg6[%c0_12, %c0_13] : memref<16x5xf32, #tpu.memory_space<vmem>>, vector<16x5xf32>
    %cst_14 = arith.constant dense<0.000000e+00> : vector<2x5xf32>
    %17 = tpu.matmul %15, %16, %cst_14 {dimension_numbers = #tpu.dot_dimension_numbers<[1], [0], [0], [1], [0, 0, 1, 1], [], []>} : vector<2x16xf32>, vector<16x5xf32>, vector<2x5xf32> -> vector<2x5xf32>
    %c0_15 = arith.constant 0 : index
    %c0_16 = arith.constant 0 : index
    %18 = vector.load %arg7[%c0_15, %c0_16] : memref<1x5xf32, #tpu.memory_space<vmem>>, vector<1x5xf32>
    %19 = vector.broadcast %18 : vector<1x5xf32> to vector<2x5xf32>
    %20 = arith.addf %17, %19 : vector<2x5xf32>
    %cst_17 = arith.constant dense<0xFF800000> : vector<2xf32>
    %21 = vector.multi_reduction <maximumf>, %20, %cst_17 [1] : vector<2x5xf32> to vector<2xf32>
    %22 = vector.shape_cast %21 : vector<2xf32> to vector<2x1xf32>
    %23 = vector.broadcast %22 : vector<2x1xf32> to vector<2x5xf32>
    %24 = arith.subf %20, %23 : vector<2x5xf32>
    %25 = math.exp %24 : vector<2x5xf32>
    %cst_18 = arith.constant dense<0.000000e+00> : vector<2xf32>
    %26 = vector.multi_reduction <add>, %25, %cst_18 [1] : vector<2x5xf32> to vector<2xf32>
    %27 = vector.shape_cast %26 : vector<2xf32> to vector<2x1xf32>
    %28 = math.log %27 : vector<2x1xf32>
    %29 = vector.broadcast %28 : vector<2x1xf32> to vector<2x5xf32>
    %30 = arith.subf %24, %29 : vector<2x5xf32>
    %c0_19 = arith.constant 0 : index
    %c0_20 = arith.constant 0 : index
    %31 = vector.load %arg8[%c0_19, %c0_20] : memref<2x5xf32, #tpu.memory_space<vmem>>, vector<2x5xf32>
    tpu.vector_store %arg8[%c0_19, %c0_20], %30 {strides = array<i32>} : memref<2x5xf32, #tpu.memory_space<vmem>>, vector<2x5xf32>,
    return
  }
  func.func @transform_0(%arg0: i32) -> (i32, i32) {
    %c0_i32 = arith.constant 0 : i32
    %c0_i32_0 = arith.constant 0 : i32
    return %arg0, %c0_i32 : i32, i32
  }
  func.func @transform_1(%arg0: i32) -> (i32, i32) {
    %c0_i32 = arith.constant 0 : i32
    %c0_i32_0 = arith.constant 0 : i32
    %c0_i32_1 = arith.constant 0 : i32
    return %c0_i32, %c0_i32_0 : i32, i32
  }
  func.func @transform_2(%arg0: i32) -> (i32, i32) {
    %c0_i32 = arith.constant 0 : i32
    %c0_i32_0 = arith.constant 0 : i32
    %c0_i32_1 = arith.constant 0 : i32
    return %c0_i32, %c0_i32_0 : i32, i32
  }
  func.func @transform_3(%arg0: i32) -> (i32, i32) {
    %c0_i32 = arith.constant 0 : i32
    %c0_i32_0 = arith.constant 0 : i32
    %c0_i32_1 = arith.constant 0 : i32
    return %c0_i32, %c0_i32_0 : i32, i32
  }
  func.func @transform_4(%arg0: i32) -> (i32, i32) {
    %c0_i32 = arith.constant 0 : i32
    %c0_i32_0 = arith.constant 0 : i32
    %c0_i32_1 = arith.constant 0 : i32
    return %c0_i32, %c0_i32_0 : i32, i32
  }
  func.func @transform_5(%arg0: i32) -> (i32, i32) {
    %c0_i32 = arith.constant 0 : i32
    %c0_i32_0 = arith.constant 0 : i32
    %c0_i32_1 = arith.constant 0 : i32
    return %c0_i32, %c0_i32_0 : i32, i32
  }
  func.func @transform_6(%arg0: i32) -> (i32, i32) {
    %c0_i32 = arith.constant 0 : i32
    %c0_i32_0 = arith.constant 0 : i32
    %c0_i32_1 = arith.constant 0 : i32
    return %c0_i32, %c0_i32_0 : i32, i32
  }
  func.func @transform_7(%arg0: i32) -> (i32, i32) {
    %c0_i32 = arith.constant 0 : i32
    %c0_i32_0 = arith.constant 0 : i32
    return %arg0, %c0_i32 : i32, i32
  }
}

</mosaic_0001>

<llo_original>
// kernel: tpu_custom_call.1
$region0: #{tpu_custom_call.1}
  #allocation0 [shape = 'u32[]', space=smem, size = 0x4, offset = 0x4, fixed_abs, tag = 'smem constant byte address 0x4 - core index']
  #allocation1 [shape = 'u32[144,128]{1,0:T(1,128)}', space=vmem, size = 0x12000, scoped, tag = 'internal scratch']
  %s0 = inlined_call_operand.vmem [shape: f32[2,256], index: 0, kind: input, shape index: {}]
  %s1 = inlined_call_operand.vmem [shape: bf16[256,16], index: 1, kind: input, shape index: {}]
  %s2 = inlined_call_operand.vmem [shape: f32[1,16], index: 2, kind: input, shape index: {}]
  %s3 = inlined_call_operand.vmem [shape: f32[16,16], index: 3, kind: input, shape index: {}]
  %s4 = inlined_call_operand.vmem [shape: f32[1,16], index: 4, kind: input, shape index: {}]
  %s5 = inlined_call_operand.vmem [shape: f32[16,5], index: 5, kind: input, shape index: {}]
  %s6 = inlined_call_operand.vmem [shape: f32[1,5], index: 6, kind: input, shape index: {}]
  %s7 = inlined_call_operand.hbm [shape: f32[2,5], index: 7, kind: output, shape index: {}]
  %s8 = sld [smem:[#allocation0]]
  $region38: #{tpu_custom_call.1} parent=0
    _
  %s10 = ssub.s32 1, %s8
  %s11 = scalar_select 0, %s10, %s8
  $region1: #{tpu_custom_call.1} parent=0
    #allocation2 [shape = 'u8[1024]{0}', space=vmem, size = 0x400, scoped, tag = 'output window, operand 0, single buffered']
    #allocation3 [shape = 's32[1]{0}', space=sflag, size = 0x4, scoped, tag = 'scoped memory for tpu_custom_call.1']
    %12 = vsyncpa [#allocation3], 0
    // Predicated region
    $region2: #{tpu_custom_call.1} parent=1 // pred_check
      _
    $region3: #{tpu_custom_call.1} parent=1 // pred_check_branch
      %14 = sbr.rel (0) target = $region5
    $region4: #{tpu_custom_call.1} parent=1 // pred_region
      _
    $region5: #{tpu_custom_call.1} parent=1 // pred_fallthru
      _
    // Predicated region
    $region6: #{tpu_custom_call.1} parent=1 // pred_check
      _
    $region7: #{tpu_custom_call.1} parent=1 // pred_check_branch
      %16 = sbr.rel (0) target = $region9
    $region8: #{tpu_custom_call.1} parent=1 // pred_region
      _
    $region9: #{tpu_custom_call.1} parent=1 // pred_fallthru
      _
    // Predicated region
    $region10: #{tpu_custom_call.1} parent=1 // pred_check
      _
    $region11: #{tpu_custom_call.1} parent=1 // pred_check_branch
      %18 = sbr.rel (0) target = $region13
    $region12: #{tpu_custom_call.1} parent=1 // pred_region
      _
    $region13: #{tpu_custom_call.1} parent=1 // pred_fallthru
      _
    // Predicated region
    $region14: #{tpu_custom_call.1} parent=1 // pred_check
      _
    $region15: #{tpu_custom_call.1} parent=1 // pred_check_branch
      %20 = sbr.rel (0) target = $region17
    $region16: #{tpu_custom_call.1} parent=1 // pred_region
      _
    $region17: #{tpu_custom_call.1} parent=1 // pred_fallthru
      _
    // Predicated region
    $region18: #{tpu_custom_call.1} parent=1 // pred_check
      _
    $region19: #{tpu_custom_call.1} parent=1 // pred_check_branch
      %22 = sbr.rel (0) target = $region21
    $region20: #{tpu_custom_call.1} parent=1 // pred_region
      _
    $region21: #{tpu_custom_call.1} parent=1 // pred_fallthru
      _
    // Predicated region
    $region22: #{tpu_custom_call.1} parent=1 // pred_check
      _
    $region23: #{tpu_custom_call.1} parent=1 // pred_check_branch
      %24 = sbr.rel (0) target = $region25
    $region24: #{tpu_custom_call.1} parent=1 // pred_region
      _
    $region25: #{tpu_custom_call.1} parent=1 // pred_fallthru
      _
    // Predicated region
    $region26: #{tpu_custom_call.1} parent=1 // pred_check
      _
    $region27: #{tpu_custom_call.1} parent=1 // pred_check_branch
      %26 = sbr.rel (0) target = $region29
    $region28: #{tpu_custom_call.1} parent=1 // pred_region
      _
    $region29: #{tpu_custom_call.1} parent=1 // pred_fallthru
      _
    %v28 = vld [vmem:[%s0] sm:$0xf]
    %v31 = vunpack.c.l.s4 1983009808
    %v32 = vunpack.c.0.s8 %v31
    %v33 = vlaneseq
    %v34 = vshrl.u32 %v33, 7
    %v35 = vsub.s32 %v32, %v34
    %v36 = vrot.slane %v28, %v35
    %v37 = vcombine.high %v36, %v36
    %v40 = vpack.c.bf16 %v36, %v36
    %v41 = vpack.c.bf16 %v37, %v37
    %v42 = vld [vmem:[%s1] sm:$0xf]
    %v43 = vld [vmem:[%s1 + $0x4] sm:$0xf]
    %v44 = vld [vmem:[%s1 + $0x8] sm:$0xf]
    %v45 = vld [vmem:[%s1 + $0xc] sm:$0xf]
    %v46 = vld [vmem:[%s1 + $0x10] sm:$0xf]
    %v47 = vld [vmem:[%s1 + $0x14] sm:$0xf]
    %v48 = vld [vmem:[%s1 + $0x18] sm:$0xf]
    %v49 = vld [vmem:[%s1 + $0x1c] sm:$0xf]
    %v50 = vld [vmem:[%s1 + $0x20] sm:$0xf]
    %v51 = vld [vmem:[%s1 + $0x24] sm:$0xf]
    %v52 = vld [vmem:[%s1 + $0x28] sm:$0xf]
    %v53 = vld [vmem:[%s1 + $0x2c] sm:$0xf]
    %v54 = vld [vmem:[%s1 + $0x30] sm:$0xf]
    %v55 = vld [vmem:[%s1 + $0x34] sm:$0xf]
    %v56 = vld [vmem:[%s1 + $0x38] sm:$0xf]
    %v57 = vld [vmem:[%s1 + $0x3c] sm:$0xf]
    %v58 = vld [vmem:[%s1 + $0x40] sm:$0xf]
    %v59 = vld [vmem:[%s1 + $0x44] sm:$0xf]
    %v60 = vld [vmem:[%s1 + $0x48] sm:$0xf]
    %v61 = vld [vmem:[%s1 + $0x4c] sm:$0xf]
    %v62 = vld [vmem:[%s1 + $0x50] sm:$0xf]
    %v63 = vld [vmem:[%s1 + $0x54] sm:$0xf]
    %v64 = vld [vmem:[%s1 + $0x58] sm:$0xf]
    %v65 = vld [vmem:[%s1 + $0x5c] sm:$0xf]
    %v66 = vld [vmem:[%s1 + $0x60] sm:$0xf]
    %v67 = vld [vmem:[%s1 + $0x64] sm:$0xf]
    %v68 = vld [vmem:[%s1 + $0x68] sm:$0xf]
    %v69 = vld [vmem:[%s1 + $0x6c] sm:$0xf]
    %v70 = vld [vmem:[%s1 + $0x70] sm:$0xf]
    %v71 = vld [vmem:[%s1 + $0x74] sm:$0xf]
    %v72 = vld [vmem:[%s1 + $0x78] sm:$0xf]
    %v73 = vld [vmem:[%s1 + $0x7c] sm:$0xf]
    %v74 = vld [vmem:[%s2] sm:$0x1]
    %v76 = vlaneseq
    %v77 = vshrl.u32 %v76, 7
    %v78 = vsub.s32 0, %v77
    %v79 = vrot.slane %v74, %v78
    %v113 = vunpack.c.l.b16 %v42
    %v114 = vunpack.c.l.b16 %v43
    %v115 = vunpack.c.l.b16 %v44
    %v116 = vunpack.c.l.b16 %v45
    %v117 = vunpack.c.l.b16 %v46
    %v118 = vunpack.c.l.b16 %v47
    %v119 = vunpack.c.l.b16 %v48
    %v120 = vunpack.c.l.b16 %v49
    %v121 = vunpack.c.l.b16 %v50
    %v122 = vunpack.c.l.b16 %v51
    %v123 = vunpack.c.l.b16 %v52
    %v124 = vunpack.c.l.b16 %v53
    %v125 = vunpack.c.l.b16 %v54
    %v126 = vunpack.c.l.b16 %v55
    %v127 = vunpack.c.l.b16 %v56
    %v128 = vunpack.c.l.b16 %v57
    %v129 = vunpack.c.l.b16 %v58
    %v130 = vunpack.c.l.b16 %v59
    %v131 = vunpack.c.l.b16 %v60
    %v132 = vunpack.c.l.b16 %v61
    %v133 = vunpack.c.l.b16 %v62
    %v134 = vunpack.c.l.b16 %v63
    %v135 = vunpack.c.l.b16 %v64
    %v136 = vunpack.c.l.b16 %v65
    %v137 = vunpack.c.l.b16 %v66
    %v138 = vunpack.c.l.b16 %v67
    %v139 = vunpack.c.l.b16 %v68
    %v140 = vunpack.c.l.b16 %v69
    %v141 = vunpack.c.l.b16 %v70
    %v142 = vunpack.c.l.b16 %v71
    %v143 = vunpack.c.l.b16 %v72
    %v144 = vunpack.c.l.b16 %v73
    %v145 = vpack.c.b16 %v114, %v113
    %v146 = vpack.c.b16 %v116, %v115
    %v147 = vpack.c.b16 %v118, %v117
    %v148 = vpack.c.b16 %v120, %v119
    %v149 = vpack.c.b16 %v122, %v121
    %v150 = vpack.c.b16 %v124, %v123
    %v151 = vpack.c.b16 %v126, %v125
    %v152 = vpack.c.b16 %v128, %v127
    %v153 = vpack.c.b16 %v130, %v129
    %v154 = vpack.c.b16 %v132, %v131
    %v155 = vpack.c.b16 %v134, %v133
    %v156 = vpack.c.b16 %v136, %v135
    %v157 = vpack.c.b16 %v138, %v137
    %v158 = vpack.c.b16 %v140, %v139
    %v159 = vpack.c.b16 %v142, %v141
    %v160 = vpack.c.b16 %v144, %v143
    %177 = vmatprep.subr.bf16.mxu0 0
    %178 = vmatpush1.bf16.msra.mxu0 %v145
    %179 = vmatprep.subr.bf16.mxu0 0
    %180 = vmatpush1.bf16.msra.mxu0 %v146
    %181 = vmatprep.subr.bf16.mxu0 0
    %182 = vmatpush1.bf16.msra.mxu0 %v147
    %183 = vmatprep.subr.bf16.mxu0 0
    %184 = vmatpush1.bf16.msra.mxu0 %v148
    %185 = vmatprep.subr.bf16.mxu0 0
    %186 = vmatpush1.bf16.msra.mxu0 %v149
    %187 = vmatprep.subr.bf16.mxu0 0
    %188 = vmatpush1.bf16.msra.mxu0 %v150
    %189 = vmatprep.subr.bf16.mxu0 0
    %190 = vmatpush1.bf16.msra.mxu0 %v151
    %191 = vmatprep.subr.bf16.mxu0 0
    %192 = vmatpush1.bf16.msra.mxu0 %v152
    %193 = vmatprep.subr.bf16.mxu0 0
    %194 = vmatpush1.bf16.msra.mxu0 %v153
    %195 = vmatprep.subr.bf16.mxu0 0
    %196 = vmatpush1.bf16.msra.mxu0 %v154
    %197 = vmatprep.subr.bf16.mxu0 0
    %198 = vmatpush1.bf16.msra.mxu0 %v155
    %199 = vmatprep.subr.bf16.mxu0 0
    %200 = vmatpush1.bf16.msra.mxu0 %v156
    %201 = vmatprep.subr.bf16.mxu0 0
    %202 = vmatpush1.bf16.msra.mxu0 %v157
    %203 = vmatprep.subr.bf16.mxu0 0
    %204 = vmatpush1.bf16.msra.mxu0 %v158
    %205 = vmatprep.subr.bf16.mxu0 0
    %206 = vmatpush1.bf16.msra.mxu0 %v159
    %207 = vmatprep.subr.bf16.mxu0 0
    %208 = vmatpush1.bf16.msra.mxu0 %v160
    %209 = vmatprep.mubr.bf16.mxu0 %v41
    %210 = vmatmul.mubr.bf16.gmra.mrb[0].mxu0 %v40
    %v211 = vpop.f32.mrb[0].mxu0
    %v212 = vadd.f32 %v79, %v211
    %v213 = vpop.f32.mrb[0].mxu0
    %v214 = vpop.f32.mrb[0].mxu0
    %v215 = vpop.f32.mrb[0].mxu0
    %216 = vdwg.mxu0
    %v217 = vmax.f32 %v212, 0.0
    %v218 = vld [vmem:[%s3] sm:$0xff]
    %v219 = vld [vmem:[%s3 + $0x8] sm:$0xff]
    %v220 = vld [vmem:[%s4] sm:$0x1]
    %v222 = vlaneseq
    %v223 = vshrl.u32 %v222, 7
    %v224 = vsub.s32 0, %v223
    %v225 = vrot.slane %v220, %v224
    %vm227 = vcmask 130048
    %v229 = vsel %vm227, %v217, 0
    %231 = vmatprep.subr.mxu0 0.0
    %232 = vmatpush1.msra.mxu0 %v218
    %233 = vmatprep.subr.mxu0 0.0
    %234 = vmatpush1.msra.mxu0 %v219
    %235 = vmatprep.subr.mxu0 0.0
    %236 = vmatpush1.msra.mxu0 0.0
    %237 = vmatprep.subr.mxu0 0.0
    %238 = vmatpush1.msra.mxu0 0.0
    %239 = vmatprep.subr.mxu0 0.0
    %240 = vmatpush1.msra.mxu0 0.0
    %241 = vmatprep.subr.mxu0 0.0
    %242 = vmatpush1.msra.mxu0 0.0
    %243 = vmatprep.subr.mxu0 0.0
    %244 = vmatpush1.msra.mxu0 0.0
    %245 = vmatprep.subr.mxu0 0.0
    %246 = vmatpush1.msra.mxu0 0.0
    %247 = vmatprep.subr.mxu0 0.0
    %248 = vmatpush1.msra.mxu0 0.0
    %249 = vmatprep.subr.mxu0 0.0
    %250 = vmatpush1.msra.mxu0 0.0
    %251 = vmatprep.subr.mxu0 0.0
    %252 = vmatpush1.msra.mxu0 0.0
    %253 = vmatprep.subr.mxu0 0.0
    %254 = vmatpush1.msra.mxu0 0.0
    %255 = vmatprep.subr.mxu0 0.0
    %256 = vmatpush1.msra.mxu0 0.0
    %257 = vmatprep.subr.mxu0 0.0
    %258 = vmatpush1.msra.mxu0 0.0
    %259 = vmatprep.subr.mxu0 0.0
    %260 = vmatpush1.msra.mxu0 0.0
    %261 = vmatprep.subr.mxu0 0.0
    %262 = vmatpush1.msra.mxu0 0.0
    %263 = vmatprep.subr.mxu0 0.0
    %264 = vmatpush1.msra.mxu0 0.0
    %265 = vmatprep.subr.mxu0 0.0
    %266 = vmatpush1.msra.mxu0 0.0
    %267 = vmatprep.subr.mxu0 0.0
    %268 = vmatpush1.msra.mxu0 0.0
    %269 = vmatprep.subr.mxu0 0.0
    %270 = vmatpush1.msra.mxu0 0.0
    %271 = vmatprep.subr.mxu0 0.0
    %272 = vmatpush1.msra.mxu0 0.0
    %273 = vmatprep.subr.mxu0 0.0
    %274 = vmatpush1.msra.mxu0 0.0
    %275 = vmatprep.subr.mxu0 0.0
    %276 = vmatpush1.msra.mxu0 0.0
    %277 = vmatprep.subr.mxu0 0.0
    %278 = vmatpush1.msra.mxu0 0.0
    %279 = vmatprep.subr.mxu0 0.0
    %280 = vmatpush1.msra.mxu0 0.0
    %281 = vmatprep.subr.mxu0 0.0
    %282 = vmatpush1.msra.mxu0 0.0
    %283 = vmatprep.subr.mxu0 0.0
    %284 = vmatpush1.msra.mxu0 0.0
    %285 = vmatprep.subr.mxu0 0.0
    %286 = vmatpush1.msra.mxu0 0.0
    %287 = vmatprep.subr.mxu0 0.0
    %288 = vmatpush1.msra.mxu0 0.0
    %289 = vmatprep.subr.mxu0 0.0
    %290 = vmatpush1.msra.mxu0 0.0
    %291 = vmatprep.subr.mxu0 0.0
    %292 = vmatpush1.msra.mxu0 0.0
    %293 = vmatprep.subr.mxu0 0.0
    %294 = vmatpush1.msra.mxu0 0.0
    %295 = vmatprep.mubr.f32.mxu0 0.0
    %296 = vmatmul.mubr.f32.gmra.mrb[0].mxu0 %v229
    %v297 = vpop.f32.mrb[0].mxu0
    %v298 = vadd.f32 %v225, %v297
    %v299 = vpop.f32.mrb[0].mxu0
    %300 = vdwg.mxu0
    %v301 = vmax.f32 %v298, 0.0
    %v302 = vld [vmem:[%s5] sm:$0xff]
    %v303 = vld [vmem:[%s5 + $0x8] sm:$0xff]
    %v304 = vld [vmem:[%s6] sm:$0x1]
    %v306 = vlaneseq
    %v307 = vshrl.u32 %v306, 7
    %v308 = vsub.s32 0, %v307
    %v309 = vrot.slane %v304, %v308
    %v312 = vsel %vm227, %v301, 0
    %314 = vmatprep.subr.mxu0 0.0
    %315 = vmatpush1.msra.mxu0 %v302
    %316 = vmatprep.subr.mxu0 0.0
    %317 = vmatpush1.msra.mxu0 %v303
    %318 = vmatprep.subr.mxu0 0.0
    %319 = vmatpush1.msra.mxu0 0.0
    %320 = vmatprep.subr.mxu0 0.0
    %321 = vmatpush1.msra.mxu0 0.0
    %322 = vmatprep.subr.mxu0 0.0
    %323 = vmatpush1.msra.mxu0 0.0
    %324 = vmatprep.subr.mxu0 0.0
    %325 = vmatpush1.msra.mxu0 0.0
    %326 = vmatprep.subr.mxu0 0.0
    %327 = vmatpush1.msra.mxu0 0.0
    %328 = vmatprep.subr.mxu0 0.0
    %329 = vmatpush1.msra.mxu0 0.0
    %330 = vmatprep.subr.mxu0 0.0
    %331 = vmatpush1.msra.mxu0 0.0
    %332 = vmatprep.subr.mxu0 0.0
    %333 = vmatpush1.msra.mxu0 0.0
    %334 = vmatprep.subr.mxu0 0.0
    %335 = vmatpush1.msra.mxu0 0.0
    %336 = vmatprep.subr.mxu0 0.0
    %337 = vmatpush1.msra.mxu0 0.0
    %338 = vmatprep.subr.mxu0 0.0
    %339 = vmatpush1.msra.mxu0 0.0
    %340 = vmatprep.subr.mxu0 0.0
    %341 = vmatpush1.msra.mxu0 0.0
    %342 = vmatprep.subr.mxu0 0.0
    %343 = vmatpush1.msra.mxu0 0.0
    %344 = vmatprep.subr.mxu0 0.0
    %345 = vmatpush1.msra.mxu0 0.0
    %346 = vmatprep.subr.mxu0 0.0
    %347 = vmatpush1.msra.mxu0 0.0
    %348 = vmatprep.subr.mxu0 0.0
    %349 = vmatpush1.msra.mxu0 0.0
    %350 = vmatprep.subr.mxu0 0.0
    %351 = vmatpush1.msra.mxu0 0.0
    %352 = vmatprep.subr.mxu0 0.0
    %353 = vmatpush1.msra.mxu0 0.0
    %354 = vmatprep.subr.mxu0 0.0
    %355 = vmatpush1.msra.mxu0 0.0
    %356 = vmatprep.subr.mxu0 0.0
    %357 = vmatpush1.msra.mxu0 0.0
    %358 = vmatprep.subr.mxu0 0.0
    %359 = vmatpush1.msra.mxu0 0.0
    %360 = vmatprep.subr.mxu0 0.0
    %361 = vmatpush1.msra.mxu0 0.0
    %362 = vmatprep.subr.mxu0 0.0
    %363 = vmatpush1.msra.mxu0 0.0
    %364 = vmatprep.subr.mxu0 0.0
    %365 = vmatpush1.msra.mxu0 0.0
    %366 = vmatprep.subr.mxu0 0.0
    %367 = vmatpush1.msra.mxu0 0.0
    %368 = vmatprep.subr.mxu0 0.0
    %369 = vmatpush1.msra.mxu0 0.0
    %370 = vmatprep.subr.mxu0 0.0
    %371 = vmatpush1.msra.mxu0 0.0
    %372 = vmatprep.subr.mxu0 0.0
    %373 = vmatpush1.msra.mxu0 0.0
    %374 = vmatprep.subr.mxu0 0.0
    %375 = vmatpush1.msra.mxu0 0.0
    %376 = vmatprep.subr.mxu0 0.0
    %377 = vmatpush1.msra.mxu0 0.0
    %378 = vmatprep.mubr.f32.mxu0 0.0
    %379 = vmatmul.mubr.f32.gmra.mrb[0].mxu0 %v312
    %v380 = vpop.f32.mrb[0].mxu0
    %v381 = vadd.f32 %v309, %v380
    %v382 = vpop.f32.mrb[0].mxu0
    %383 = vdwg.mxu0
    %vm384 = vcmask 33792
    %v385 = vsel %vm384, %v381, -inf
    %386 = vmax.xlane.f32.xlu0 %v385
    %v387 = vpop.xlane.xlu0 %386
    %v388 = vsub.f32 %v381, %v387
    %v389 = vmul.f32 %v388, 1.442695
    %v390 = vpow.pop %v389
    %v391 = vsel %vm384, %v390, 0.0
    %392 = vadd.xlane.f32.xlu0 %v391
    %v393 = vpop.xlane.xlu0 %392
    %v394 = vlog2.pop %v393
    %v395 = vmul.f32 %v394, 0.6931472
    %v396 = vsub.f32 %v388, %v395
    %397 = vst.msk [vmem:[#allocation2] sm:$0x3] %vm384, %v396
    // Predicated region
    $region30: #{tpu_custom_call.1} parent=1 // pred_check
      _
    $region31: #{tpu_custom_call.1} parent=1 // pred_check_branch
      %399 = sbr.rel (0) target = $region33
    $region32: #{tpu_custom_call.1} parent=1 // pred_region
      %s401 = ssub.s32 32, 32
      %402 = vsyncadd [#allocation3], %s401
      %s404 = sshll.u32 [#allocation2], 4
      %s405 = int_to_ptr.vmem [resolvable:$true] %s404
      %407 = dma.vmem_to_hbm [thread:$0]  %s405, 32, %s7, [#allocation3]
    $region33: #{tpu_custom_call.1} parent=1 // pred_fallthru
      _
    // Predicated region
    $region34: #{tpu_custom_call.1} parent=1 // pred_check
      _
    $region35: #{tpu_custom_call.1} parent=1 // pred_check_branch
      %409 = sbr.rel (0) target = $region37
    $region36: #{tpu_custom_call.1} parent=1 // pred_region
      %410 = dma.done [#allocation3], 32
    $region37: #{tpu_custom_call.1} parent=1 // pred_fallthru
      _
    %411 = vsyncpa [#allocation3], 1

</llo_original>
